<compile_context>
chip_gen: v7x
topology: tpu7x:2x2x1
jax: 0.10.0
libtpu: 0.0.40
codegen_flags: <defaults>
</compile_context>

<pallas_src>
import functools

import jax
import jax.numpy as jnp
from jax.experimental import pallas as pl
from jax.experimental.pallas import tpu as pltpu

# ----------------------------- sizes -----------------------------------------
ENSEMBLE_SIZE = 4      # E
STATE_DIM     = 16     # S  (goal has the same dim)
ACTION_DIM    = 8      # A
HIDDEN_DIM    = 32     # H
LANES         = 128    # lane width; E*H == 128 exactly
ACTION_LOW, ACTION_HIGH = -1.0, 1.0

ACT_OFF = 2 * STATE_DIM                      # action lives at lanes 32..39 everywhere
SG_DIM  = 2 * STATE_DIM                      # 32 : [state | goal]
XA_PAD  = 48                                 # [state | goal | action] padded to 48 lanes
FUSE_K  = ENSEMBLE_SIZE * HIDDEN_DIM + SG_DIM  # 160 : [h2 | state | goal]
SEG_K   = ENSEMBLE_SIZE * STATE_DIM            # 64  : per-member diff lanes

# slab row offsets (all multiples of 16 -> bf16 sublane aligned)
P_W1   = 0                     # (32,128)  action_model layer 1 ([w1s; w1g])
P_W2   = P_W1 + SG_DIM         # 32  (32,128)  action_model layer 2
P_WD1  = P_W2 + HIDDEN_DIM     # 64  (48,128)  dynamics layer 1 (state rows + action rows)
P_FUSE = P_WD1 + XA_PAD        # 112 (160,128) [WD2 block-diag ; +I(state) ; -I(goal)]
P_SEG  = P_FUSE + FUSE_K       # 272 (64,128)  per-member segment-sum (x 1/E^2)
SLAB_ROWS = P_SEG + SEG_K      # 336

TILE_B = 8                     # batch rows per grid step (one sublane tile)


# ----------------------------- kernel ----------------------------------------
def planner_kernel(in_ref, p_ref, b_ref, out_ref):
    sg = in_ref[...]                                   # (TB,128) f32: [state | goal | 0...]
    sg_bf = sg.astype(jnp.bfloat16)

    b1  = b_ref[0:1, :]                                # (1,128) f32 bias rows
    b2  = b_ref[1:2, :]
    bd1 = b_ref[2:3, :]
    bd2 = b_ref[3:4, :]

    # ---- action_model (shared across ensemble members) ----
    h = jnp.maximum(
        jnp.dot(sg_bf[:, :SG_DIM], p_ref[P_W1:P_W1 + SG_DIM, :],
                preferred_element_type=jnp.float32) + b1, 0.0)          # (TB,128), cols 0..31

    a = jnp.tanh(
        jnp.dot(h[:, :HIDDEN_DIM].astype(jnp.bfloat16),
                p_ref[P_W2:P_W2 + HIDDEN_DIM, :],
                preferred_element_type=jnp.float32) + b2)               # action at lanes 32..39
    a = jnp.clip(a, ACTION_LOW, ACTION_HIGH)           # symmetric bounds -> pad lanes stay 0

    # ---- ensemble dynamics layer 1, flattened to E*H = 128 lanes ----
    xa = sg + a                                        # [state | goal(ignored) | action | 0...]
    h2 = jnp.maximum(
        jnp.dot(xa[:, :XA_PAD].astype(jnp.bfloat16),
                p_ref[P_WD1:P_WD1 + XA_PAD, :],
                preferred_element_type=jnp.float32) + bd1, 0.0)         # (TB,128) per-member H

    # ---- fused (WD2 | DIFF): diff = next_state - goal per member, lanes 0..63 ----
    lhs = jnp.concatenate([h2.astype(jnp.bfloat16), sg_bf[:, :SG_DIM]], axis=-1)  # (TB,160)
    diff = (jnp.dot(lhs, p_ref[P_FUSE:P_FUSE + FUSE_K, :],
                    preferred_element_type=jnp.float32) + bd2)          # (TB,128), lanes 64+ = 0

    # ---- per-member squared norms via segment-sum matmul (1/E^2 folded in) ----
    d2 = diff * diff
    seg = p_ref[P_SEG:P_SEG + SEG_K, :].astype(jnp.float32)
    sumsq = jnp.dot(d2[:, :SEG_K], seg, preferred_element_type=jnp.float32)   # (TB,128)
    reward = -jnp.sum(jnp.sqrt(sumsq), axis=-1, keepdims=True)          # (TB,1) = -mean ||diff||

    # ---- pack outputs: lane 0 = reward, lanes 32..39 = mean action (== a) ----
    lane = jax.lax.broadcasted_iota(jnp.int32, a.shape, 1)
    out_ref[...] = jnp.where(lane == 0, jnp.broadcast_to(reward, a.shape), a)


# ----------------------------- packing (init-time) ---------------------------
def pack_params(params):
    """Pack weights into one bf16 (336,128) slab + one f32 (8,128) bias block."""
    E, S, A, H, L = ENSEMBLE_SIZE, STATE_DIM, ACTION_DIM, HIDDEN_DIM, LANES
    f32 = jnp.float32

    w1 = jnp.zeros((SG_DIM, L), f32)
    w1 = w1.at[0:S, 0:H].set(params['w1s'])
    w1 = w1.at[S:2 * S, 0:H].set(params['w1g'])

    w2 = jnp.zeros((H, L), f32).at[:, ACT_OFF:ACT_OFF + A].set(params['w2'])

    wd1 = jnp.zeros((XA_PAD, L), f32)
    wd1 = wd1.at[0:S, :].set(jnp.transpose(params['wd1s'], (1, 0, 2)).reshape(S, E * H))
    wd1 = wd1.at[ACT_OFF:ACT_OFF + A, :].set(
        jnp.transpose(params['wd1a'], (1, 0, 2)).reshape(A, E * H))

    fuse = jnp.zeros((FUSE_K, L), f32)
    eye = jnp.eye(S, dtype=f32)
    for m in range(E):
        fuse = fuse.at[m * H:(m + 1) * H, m * S:(m + 1) * S].set(params['wd2'][m])
        fuse = fuse.at[E * H:E * H + S, m * S:(m + 1) * S].set(eye)           # + state
        fuse = fuse.at[E * H + S:E * H + 2 * S, m * S:(m + 1) * S].set(-eye)  # - goal

    seg = jnp.zeros((SEG_K, L), f32)
    for m in range(E):
        seg = seg.at[m * S:(m + 1) * S, m].set(1.0 / (E * E))   # (1/E)^2 -> mean after sqrt

    slab = jnp.concatenate([w1, w2, wd1, fuse, seg], axis=0).astype(jnp.bfloat16)
    assert slab.shape == (SLAB_ROWS, LANES)

    biases = jnp.zeros((8, L), f32)
    biases = biases.at[0, 0:H].set(params['b1'][0])
    biases = biases.at[1, ACT_OFF:ACT_OFF + A].set(params['b2'][0])
    biases = biases.at[2, :].set(params['bd1'].reshape(E * H))
    biases = biases.at[3, 0:E * S].set(params['bd2'].reshape(E * S))
    return slab, biases


def pack_inputs(states, goals):
    """states, goals: (B, S) -> lane-dense (B, 128) rows [state | goal | 0...]."""
    B = states.shape[0]
    rows = jnp.zeros((B, LANES), jnp.float32)
    rows = rows.at[:, 0:STATE_DIM].set(states.astype(jnp.float32))
    rows = rows.at[:, STATE_DIM:2 * STATE_DIM].set(goals.astype(jnp.float32))
    return rows


# ----------------------------- wrappers ----------------------------------------
@jax.jit
def low_level_planner_forward_batched(states, goals, slab, biases):
    """states, goals: (B, S) -> (actions (B, A), rewards (B,))."""
    B = states.shape[0]
    rows = pack_inputs(states, goals)
    pad = (-B) % TILE_B
    if pad:
        rows = jnp.concatenate([rows, jnp.zeros((pad, LANES), jnp.float32)], axis=0)
    Bp = B + pad

    out = pl.pallas_call(
        planner_kernel,
        out_shape=jax.ShapeDtypeStruct((Bp, LANES), jnp.float32),
        grid_spec=pltpu.PrefetchScalarGridSpec(
            num_scalar_prefetch=0,
            grid=(Bp // TILE_B,),
            in_specs=[
                pl.BlockSpec((TILE_B, LANES), lambda i: (i, 0)),      # query rows: tiled
                pl.BlockSpec((SLAB_ROWS, LANES), lambda i: (0, 0)),   # slab: resident (DMA once)
                pl.BlockSpec((8, LANES), lambda i: (0, 0)),           # f32 biases: resident
            ],
            out_specs=pl.BlockSpec((TILE_B, LANES), lambda i: (i, 0)),
        ),
        compiler_params=pltpu.CompilerParams(
            dimension_semantics=("parallel",)),       # shard batch tiles across TCs on v7x
    )(rows, slab, biases)

    actions = out[:B, ACT_OFF:ACT_OFF + ACTION_DIM]
    rewards = out[:B, 0]
    return actions, rewards


def low_level_planner_forward(state, goal, slab, biases):
    """Single query, matching the original module's forward signature."""
    actions, rewards = low_level_planner_forward_batched(state[None], goal[None], slab, biases)
    return actions[0], rewards[0]


# ----------------------------- reference (pure JAX) ----------------------------
def reference_forward(state, goal, params):
    E, S = ENSEMBLE_SIZE, STATE_DIM
    st = jnp.broadcast_to(state[None, :], (E, S))
    gl = jnp.broadcast_to(goal[None, :], (E, S))
    h = jax.nn.relu(st @ params['w1s'] + gl @ params['w1g'] + params['b1'])
    a = jnp.tanh(h @ params['w2'] + params['b2'])
    a = jnp.clip(a, ACTION_LOW, ACTION_HIGH)
    h2 = jax.nn.relu(jnp.einsum('es,esh->eh', st, params['wd1s'])
                     + jnp.einsum('ea,eah->eh', a, params['wd1a'])
                     + params['bd1'])
    nxt = st + jnp.einsum('eh,ehs->es', h2, params['wd2']) + params['bd2']
    reward = -jnp.mean(jnp.sqrt(jnp.sum((nxt - gl) ** 2, axis=-1)))
    return a.mean(axis=0), reward


# ----------------------------- main -------------------------------------------
if __name__ == "__main__":
    E, S, A, H = ENSEMBLE_SIZE, STATE_DIM, ACTION_DIM, HIDDEN_DIM
    B = 16                                   # small demo batch -> grid=(2,)
    key = jax.random.PRNGKey(0)
    ks = jax.random.split(key, 12)

    params = {
        # action_model (shared)
        'w1s': 0.1 * jax.random.normal(ks[0], (S, H), jnp.float32),
        'w1g': 0.1 * jax.random.normal(ks[1], (S, H), jnp.float32),
        'b1':  0.1 * jax.random.normal(ks[2], (1, H), jnp.float32),
        'w2':  0.1 * jax.random.normal(ks[3], (H, A), jnp.float32),
        'b2':  0.1 * jax.random.normal(ks[4], (1, A), jnp.float32),
        # ensemble dynamics (per-member)
        'wd1s': 0.1 * jax.random.normal(ks[5], (E, S, H), jnp.float32),
        'wd1a': 0.1 * jax.random.normal(ks[6], (E, A, H), jnp.float32),
        'bd1':  0.1 * jax.random.normal(ks[7], (E, H), jnp.float32),
        'wd2':  0.1 * jax.random.normal(ks[8], (E, H, S), jnp.float32),
        'bd2':  0.1 * jax.random.normal(ks[9], (E, S), jnp.float32),
    }

    states = jax.random.normal(ks[10], (B, S), jnp.float32)
    goals  = jax.random.normal(ks[11], (B, S), jnp.float32)

    slab, biases = pack_params(params)       # one-time packing (bf16 weights, f32 biases)

    # batched forward (B independent queries in one kernel launch)
    actions, rewards = low_level_planner_forward_batched(states, goals, slab, biases)
    jax.block_until_ready((actions, rewards))

    actions_ref, rewards_ref = jax.vmap(lambda s, g: reference_forward(s, g, params))(states, goals)

    assert actions.shape == (B, A)
    assert rewards.shape == (B,)
    # bf16 weights -> loosened tolerances (per perf review)
    assert jnp.allclose(actions, actions_ref, atol=2e-2), (actions, actions_ref)
    assert jnp.allclose(rewards, rewards_ref, rtol=2e-2, atol=2e-2), (rewards, rewards_ref)

    # single-query path (original module signature)
    a0, r0 = low_level_planner_forward(states[0], goals[0], slab, biases)
    jax.block_until_ready((a0, r0))
    a0_ref, r0_ref = reference_forward(states[0], goals[0], params)
    assert jnp.allclose(a0, a0_ref, atol=2e-2)
    assert jnp.allclose(r0, r0_ref, rtol=2e-2, atol=2e-2)

    print("KERNEL_OK")
</pallas_src>

<mosaic_0001>
module attributes {stable_mosaic.version = 11 : i64} {
  func.func @planner_kernel(%arg0: i32, %arg1: memref<8x128xf32, #tpu.memory_space<vmem>>, %arg2: memref<336x128xbf16, #tpu.memory_space<vmem>>, %arg3: memref<8x128xf32, #tpu.memory_space<vmem>>, %arg4: memref<8x128xf32, #tpu.memory_space<vmem>>) attributes {dimension_semantics = [#tpu.dimension_semantics<parallel>], iteration_bounds = array<i64: 2>, scalar_prefetch = 0 : i64, scratch_operands = 0 : i64, tpu.core_type = #tpu.core_type<tc>, window_params = [{transform_indices = @transform_0, window_bounds = array<i64: 8, 128>}, {pipeline_mode = #tpu.pipeline_mode<synchronous>, transform_indices = @transform_1, window_bounds = array<i64: 336, 128>}, {pipeline_mode = #tpu.pipeline_mode<synchronous>, transform_indices = @transform_2, window_bounds = array<i64: 8, 128>}, {transform_indices = @transform_3, window_bounds = array<i64: 8, 128>}]} {
    %c0 = arith.constant 0 : index
    %c0_0 = arith.constant 0 : index
    %0 = vector.load %arg1[%c0, %c0_0] : memref<8x128xf32, #tpu.memory_space<vmem>>, vector<8x128xf32>
    %1 = arith.truncf %0 : vector<8x128xf32> to vector<8x128xbf16>
    %c0_1 = arith.constant 0 : index
    %c0_2 = arith.constant 0 : index
    %2 = vector.load %arg3[%c0_1, %c0_2] : memref<8x128xf32, #tpu.memory_space<vmem>>, vector<1x128xf32>
    %c1 = arith.constant 1 : index
    %c0_3 = arith.constant 0 : index
    %3 = vector.load %arg3[%c1, %c0_3] : memref<8x128xf32, #tpu.memory_space<vmem>>, vector<1x128xf32>
    %c2 = arith.constant 2 : index
    %c0_4 = arith.constant 0 : index
    %4 = vector.load %arg3[%c2, %c0_4] : memref<8x128xf32, #tpu.memory_space<vmem>>, vector<1x128xf32>
    %c3 = arith.constant 3 : index
    %c0_5 = arith.constant 0 : index
    %5 = vector.load %arg3[%c3, %c0_5] : memref<8x128xf32, #tpu.memory_space<vmem>>, vector<1x128xf32>
    %6 = vector.extract_strided_slice %1 {offsets = [0, 0], sizes = [8, 32], strides = [1, 1]} : vector<8x128xbf16> to vector<8x32xbf16>
    %c0_6 = arith.constant 0 : index
    %c0_7 = arith.constant 0 : index
    %7 = vector.load %arg2[%c0_6, %c0_7] : memref<336x128xbf16, #tpu.memory_space<vmem>>, vector<32x128xbf16>
    %cst = arith.constant dense<0.000000e+00> : vector<8x128xf32>
    %8 = tpu.matmul %6, %7, %cst {dimension_numbers = #tpu.dot_dimension_numbers<[1], [0], [0], [1], [0, 0, 1, 1], [], []>} : vector<8x32xbf16>, vector<32x128xbf16>, vector<8x128xf32> -> vector<8x128xf32>
    %9 = vector.broadcast %2 : vector<1x128xf32> to vector<8x128xf32>
    %10 = arith.addf %8, %9 : vector<8x128xf32>
    %cst_8 = arith.constant 0.000000e+00 : f32
    %11 = vector.broadcast %cst_8 : f32 to vector<8x128xf32>
    %12 = arith.maximumf %10, %11 : vector<8x128xf32>
    %13 = vector.extract_strided_slice %12 {offsets = [0, 0], sizes = [8, 32], strides = [1, 1]} : vector<8x128xf32> to vector<8x32xf32>
    %14 = arith.truncf %13 : vector<8x32xf32> to vector<8x32xbf16>
    %c32 = arith.constant 32 : index
    %c0_9 = arith.constant 0 : index
    %15 = vector.load %arg2[%c32, %c0_9] : memref<336x128xbf16, #tpu.memory_space<vmem>>, vector<32x128xbf16>
    %cst_10 = arith.constant dense<0.000000e+00> : vector<8x128xf32>
    %16 = tpu.matmul %14, %15, %cst_10 {dimension_numbers = #tpu.dot_dimension_numbers<[1], [0], [0], [1], [0, 0, 1, 1], [], []>} : vector<8x32xbf16>, vector<32x128xbf16>, vector<8x128xf32> -> vector<8x128xf32>
    %17 = vector.broadcast %3 : vector<1x128xf32> to vector<8x128xf32>
    %18 = arith.addf %16, %17 : vector<8x128xf32>
    %19 = math.tanh %18 : vector<8x128xf32>
    %cst_11 = arith.constant -1.000000e+00 : f32
    %cst_12 = arith.constant 1.000000e+00 : f32
    %20 = vector.broadcast %cst_11 : f32 to vector<8x128xf32>
    %21 = arith.maximumf %20, %19 : vector<8x128xf32>
    %22 = vector.broadcast %cst_12 : f32 to vector<8x128xf32>
    %23 = arith.minimumf %22, %21 : vector<8x128xf32>
    %24 = arith.addf %0, %23 : vector<8x128xf32>
    %25 = vector.extract_strided_slice %24 {offsets = [0, 0], sizes = [8, 48], strides = [1, 1]} : vector<8x128xf32> to vector<8x48xf32>
    %26 = arith.truncf %25 : vector<8x48xf32> to vector<8x48xbf16>
    %c64 = arith.constant 64 : index
    %c0_13 = arith.constant 0 : index
    %27 = vector.load %arg2[%c64, %c0_13] : memref<336x128xbf16, #tpu.memory_space<vmem>>, vector<48x128xbf16>
    %cst_14 = arith.constant dense<0.000000e+00> : vector<8x128xf32>
    %28 = tpu.matmul %26, %27, %cst_14 {dimension_numbers = #tpu.dot_dimension_numbers<[1], [0], [0], [1], [0, 0, 1, 1], [], []>} : vector<8x48xbf16>, vector<48x128xbf16>, vector<8x128xf32> -> vector<8x128xf32>
    %29 = vector.broadcast %4 : vector<1x128xf32> to vector<8x128xf32>
    %30 = arith.addf %28, %29 : vector<8x128xf32>
    %cst_15 = arith.constant 0.000000e+00 : f32
    %31 = vector.broadcast %cst_15 : f32 to vector<8x128xf32>
    %32 = arith.maximumf %30, %31 : vector<8x128xf32>
    %33 = arith.truncf %32 : vector<8x128xf32> to vector<8x128xbf16>
    %34 = vector.extract_strided_slice %1 {offsets = [0, 0], sizes = [8, 32], strides = [1, 1]} : vector<8x128xbf16> to vector<8x32xbf16>
    %35 = tpu.concatenate %33, %34 in 1 : vector<8x128xbf16>, vector<8x32xbf16> -> vector<8x160xbf16>
    %c112 = arith.constant 112 : index
    %c0_16 = arith.constant 0 : index
    %36 = vector.load %arg2[%c112, %c0_16] : memref<336x128xbf16, #tpu.memory_space<vmem>>, vector<160x128xbf16>
    %cst_17 = arith.constant dense<0.000000e+00> : vector<8x128xf32>
    %37 = tpu.matmul %35, %36, %cst_17 {dimension_numbers = #tpu.dot_dimension_numbers<[1], [0], [0], [1], [0, 0, 1, 1], [], []>} : vector<8x160xbf16>, vector<160x128xbf16>, vector<8x128xf32> -> vector<8x128xf32>
    %38 = vector.broadcast %5 : vector<1x128xf32> to vector<8x128xf32>
    %39 = arith.addf %37, %38 : vector<8x128xf32>
    %40 = arith.mulf %39, %39 : vector<8x128xf32>
    %c272 = arith.constant 272 : index
    %c0_18 = arith.constant 0 : index
    %41 = vector.load %arg2[%c272, %c0_18] : memref<336x128xbf16, #tpu.memory_space<vmem>>, vector<64x128xbf16>
    %42 = arith.extf %41 : vector<64x128xbf16> to vector<64x128xf32>
    %43 = vector.extract_strided_slice %40 {offsets = [0, 0], sizes = [8, 64], strides = [1, 1]} : vector<8x128xf32> to vector<8x64xf32>
    %cst_19 = arith.constant dense<0.000000e+00> : vector<8x128xf32>
    %44 = tpu.matmul %43, %42, %cst_19 {dimension_numbers = #tpu.dot_dimension_numbers<[1], [0], [0], [1], [0, 0, 1, 1], [], []>} : vector<8x64xf32>, vector<64x128xf32>, vector<8x128xf32> -> vector<8x128xf32>
    %45 = math.sqrt %44 : vector<8x128xf32>
    %cst_20 = arith.constant dense<0.000000e+00> : vector<8xf32>
    %46 = vector.multi_reduction <add>, %45, %cst_20 [1] : vector<8x128xf32> to vector<8xf32>
    %47 = vector.shape_cast %46 : vector<8xf32> to vector<8x1xf32>
    %cst_21 = arith.constant 0.000000e+00 : f32
    %48 = vector.broadcast %cst_21 : f32 to vector<8x1xf32>
    %49 = arith.subf %48, %47 : vector<8x1xf32>
    %50 = tpu.iota {dimensions = array<i32: 1>} : vector<8x128xi32>
    %c0_i32 = arith.constant 0 : i32
    %51 = vector.broadcast %c0_i32 : i32 to vector<8x128xi32>
    %52 = arith.cmpi eq, %50, %51 : vector<8x128xi32>
    %53 = vector.shape_cast %49 : vector<8x1xf32> to vector<8x1xf32>
    %54 = vector.broadcast %53 : vector<8x1xf32> to vector<8x128xf32>
    %55 = arith.select %52, %54, %23 : vector<8x128xi1>, vector<8x128xf32>
    %c0_22 = arith.constant 0 : index
    %c0_23 = arith.constant 0 : index
    %56 = vector.load %arg4[%c0_22, %c0_23] : memref<8x128xf32, #tpu.memory_space<vmem>>, vector<8x128xf32>
    tpu.vector_store %arg4[%c0_22, %c0_23], %55 {strides = array<i32>} : memref<8x128xf32, #tpu.memory_space<vmem>>, vector<8x128xf32>,
    return
  }
  func.func @transform_0(%arg0: i32) -> (i32, i32) {
    %c0_i32 = arith.constant 0 : i32
    %c0_i32_0 = arith.constant 0 : i32
    return %arg0, %c0_i32 : i32, i32
  }
  func.func @transform_1(%arg0: i32) -> (i32, i32) {
    %c0_i32 = arith.constant 0 : i32
    %c0_i32_0 = arith.constant 0 : i32
    %c0_i32_1 = arith.constant 0 : i32
    return %c0_i32, %c0_i32_0 : i32, i32
  }
  func.func @transform_2(%arg0: i32) -> (i32, i32) {
    %c0_i32 = arith.constant 0 : i32
    %c0_i32_0 = arith.constant 0 : i32
    %c0_i32_1 = arith.constant 0 : i32
    return %c0_i32, %c0_i32_0 : i32, i32
  }
  func.func @transform_3(%arg0: i32) -> (i32, i32) {
    %c0_i32 = arith.constant 0 : i32
    %c0_i32_0 = arith.constant 0 : i32
    return %arg0, %c0_i32 : i32, i32
  }
}

</mosaic_0001>

<llo_original>
// kernel: low_level_planner_forward_batched.1
$region0: #{low_level_planner_forward_batched.1}
  #allocation0 [shape = 'u32[]', space=smem, size = 0x4, offset = 0x4, fixed_abs, tag = 'smem constant byte address 0x4 - core index']
  #allocation1 [shape = 'u32[144,128]{1,0:T(1,128)}', space=vmem, size = 0x12000, scoped, tag = 'internal scratch']
  %s0 = inlined_call_operand.vmem [shape: f32[16,128], index: 0, kind: input, shape index: {}]
  %s1 = inlined_call_operand.hbm [shape: bf16[336,128], index: 1, kind: input, shape index: {}]
  %s2 = inlined_call_operand.vmem [shape: f32[8,128], index: 2, kind: input, shape index: {}]
  %s3 = inlined_call_operand.vmem [shape: f32[16,128], index: 3, kind: output, shape index: {}]
  %s4 = sld [smem:[#allocation0]]
  $region49: #{low_level_planner_forward_batched.1} parent=0
    _
  %s6 = ssub.s32 1, %s4
  %s7 = scalar_select 0, %s6, %s4
  $region1: #{low_level_planner_forward_batched.1} parent=0
    #allocation2 [shape = 'u8[86016]{0}', space=vmem, size = 0x15000, scoped, tag = 'input window, operand 1, single buffered']
    #allocation3 [shape = 's32[2]{0}', space=sflag, size = 0x8, scoped, tag = 'scoped memory for low_level_planner_forward_batched.1']
    %8 = vsyncpa [#allocation3], 0
    loop: start=0, step=1, limit=4
    $region2: #{low_level_planner_forward_batched.1} parent=1 // loop_pre_header
      _
    $region3: #{low_level_planner_forward_batched.1} parent=1 // loop_header
      %s10 = sphi 0, %s14
      %p11 = scmp.ge.s32.totalorder %s10, 4
      %s20 = sphi 0, %s22
      %s23 = sphi 0, %s20
      %s24 = sphi 0, %s23
      %s40 = sphi 0, %s24
      %s44 = sphi 0, %s44
      %s46 = sphi 0, %s44
      %s47 = sphi 0, %s46
      %s61 = sphi 0, %s47
      %s65 = sphi 0, %s65
      %s67 = sphi 0, %s65
      %s68 = sphi 0, %s67
      %s82 = sphi 0, %s68
      %s88 = sphi 0, %s90
      %s91 = sphi 0, %s88
      %s92 = sphi 0, %s91
      %s108 = sphi 0, %s92
    $region4: #{low_level_planner_forward_batched.1} parent=1 // loop_header_branch
      %13 = sbr.rel (%p11) target = $region8
    $region5: #{low_level_planner_forward_batched.1} parent=1 // loop_body
      %s15 = ssub.s32 %s10, 1
      %s16 = ssub.s32 %s10, 2
      %s17 = sadd.s32 %s10, 1
      %s18 = ssub.s32 %s10, %s17
      %p19 = scmp.eq.s32.totalorder %s18, 0
      %s21 = sadd.s32 %s20, 1
      %s22 = scalar_select %p19, %s20, %s21
      %p25 = pneg %p19
      %p26 = scmp.eq.s32.totalorder %s10, 1
      %p27 = por %p25, %p26
      %p28 = scmp.ne.s32.totalorder %s20, %s23
      %p29 = scmp.eq.s32.totalorder %s10, 0
      %p30 = por %p28, %p29
      %p31 = scmp.ne.s32.totalorder %s20, %s23
      %p32 = scmp.eq.s32.totalorder %s15, 1
      %p33 = por %p31, %p32
      %p34 = scmp.ne.s32.totalorder %s23, %s24
      %p35 = scmp.eq.s32.totalorder %s15, 0
      %p36 = por %p34, %p35
      %p37 = scmp.ne.s32.totalorder %s23, %s24
      %p38 = scmp.eq.s32.totalorder %s16, 1
      %p39 = por %p37, %p38
      %p41 = scmp.ne.s32.totalorder %s24, %s40
      %p42 = scmp.eq.s32.totalorder %s16, 0
      %p43 = por %p41, %p42
      %s45 = sadd.s32 %s44, 1
      %p48 = scmp.eq.s32.totalorder %s10, 1
      %p49 = scmp.ne.s32.totalorder %s44, %s46
      %p50 = scmp.eq.s32.totalorder %s10, 0
      %p51 = por %p49, %p50
      %p52 = scmp.ne.s32.totalorder %s44, %s46
      %p53 = scmp.eq.s32.totalorder %s15, 1
      %p54 = por %p52, %p53
      %p55 = scmp.ne.s32.totalorder %s46, %s47
      %p56 = scmp.eq.s32.totalorder %s15, 0
      %p57 = por %p55, %p56
      %p58 = scmp.ne.s32.totalorder %s46, %s47
      %p59 = scmp.eq.s32.totalorder %s16, 1
      %p60 = por %p58, %p59
      %p62 = scmp.ne.s32.totalorder %s47, %s61
      %p63 = scmp.eq.s32.totalorder %s16, 0
      %p64 = por %p62, %p63
      %s66 = sadd.s32 %s65, 1
      %p69 = scmp.eq.s32.totalorder %s10, 1
      %p70 = scmp.ne.s32.totalorder %s65, %s67
      %p71 = scmp.eq.s32.totalorder %s10, 0
      %p72 = por %p70, %p71
      %p73 = scmp.ne.s32.totalorder %s65, %s67
      %p74 = scmp.eq.s32.totalorder %s15, 1
      %p75 = por %p73, %p74
      %p76 = scmp.ne.s32.totalorder %s67, %s68
      %p77 = scmp.eq.s32.totalorder %s15, 0
      %p78 = por %p76, %p77
      %p79 = scmp.ne.s32.totalorder %s67, %s68
      %p80 = scmp.eq.s32.totalorder %s16, 1
      %p81 = por %p79, %p80
      %p83 = scmp.ne.s32.totalorder %s68, %s82
      %p84 = scmp.eq.s32.totalorder %s16, 0
      %p85 = por %p83, %p84
      %s86 = ssub.s32 %s10, %s17
      %p87 = scmp.eq.s32.totalorder %s86, 0
      %s89 = sadd.s32 %s88, 1
      %s90 = scalar_select %p87, %s88, %s89
      %p93 = pneg %p87
      %p94 = scmp.eq.s32.totalorder %s10, 1
      %p95 = por %p93, %p94
      %p96 = scmp.ne.s32.totalorder %s88, %s91
      %p97 = scmp.eq.s32.totalorder %s10, 0
      %p98 = por %p96, %p97
      %p99 = scmp.ne.s32.totalorder %s88, %s91
      %p100 = scmp.eq.s32.totalorder %s15, 1
      %p101 = por %p99, %p100
      %p102 = scmp.ne.s32.totalorder %s91, %s92
      %p103 = scmp.eq.s32.totalorder %s15, 0
      %p104 = por %p102, %p103
      %p105 = scmp.ne.s32.totalorder %s91, %s92
      %p106 = scmp.eq.s32.totalorder %s16, 1
      %p107 = por %p105, %p106
      %p109 = scmp.ne.s32.totalorder %s92, %s108
      %p110 = scmp.eq.s32.totalorder %s16, 0
      %p111 = por %p109, %p110
      %p112 = scmp.le.s32.totalorder 1, %s10
      %p113 = scmp.lt.s32.totalorder %s10, 3
      %p114 = pnand %p112, %p113
      %p115 = pneg %p114
      // Predicated region
      $region9: #{low_level_planner_forward_batched.1} parent=5 // pred_check
        _
      $region10: #{low_level_planner_forward_batched.1} parent=5 // pred_check_branch
        %117 = sbr.rel (%p114) target = $region12
      $region11: #{low_level_planner_forward_batched.1} parent=5 // pred_region
        %s118 = ssub.s32 %s10, 1
        // Predicated region
        $region13: #{low_level_planner_forward_batched.1} parent=11 // pred_check
          %p119 = pneg %p57
        $region14: #{low_level_planner_forward_batched.1} parent=11 // pred_check_branch
          %121 = sbr.rel (%p119) target = $region16
        $region15: #{low_level_planner_forward_batched.1} parent=11 // pred_region
          %s123 = ssub.s32 2688, 2688
          %124 = vsyncadd [#allocation3], %s123
          %s125 = sshll.u32 [#allocation2], 4
          %s126 = int_to_ptr.vmem [resolvable:$true] %s125
          %131 = dma.hbm_to_vmem [thread:$0]  %s1, 2688, %s126, [#allocation3], 64, 64, 4
        $region16: #{low_level_planner_forward_batched.1} parent=11 // pred_fallthru
          _
        // Predicated region
        $region17: #{low_level_planner_forward_batched.1} parent=11 // pred_check
          %p132 = pneg %p78
        $region18: #{low_level_planner_forward_batched.1} parent=11 // pred_check_branch
          %134 = sbr.rel (%p132) target = $region20
        $region19: #{low_level_planner_forward_batched.1} parent=11 // pred_region
          _
        $region20: #{low_level_planner_forward_batched.1} parent=11 // pred_fallthru
          _
      $region12: #{low_level_planner_forward_batched.1} parent=5 // pred_fallthru
        _
      %p135 = scmp.lt.s32.totalorder %s10, 2
      // Predicated region
      $region21: #{low_level_planner_forward_batched.1} parent=5 // pred_check
        %p136 = pneg %p135
      $region22: #{low_level_planner_forward_batched.1} parent=5 // pred_check_branch
        %138 = sbr.rel (%p136) target = $region24
      $region23: #{low_level_planner_forward_batched.1} parent=5 // pred_region
        // Predicated region
        $region25: #{low_level_planner_forward_batched.1} parent=23 // pred_check
          %p139 = pneg %p30
        $region26: #{low_level_planner_forward_batched.1} parent=23 // pred_check_branch
          %141 = sbr.rel (%p139) target = $region28
        $region27: #{low_level_planner_forward_batched.1} parent=23 // pred_region
          %p142 = scmp.lt.s32.totalorder %s10, 1
          %s143 = scalar_select %p142, %s10, 1
          %s144 = smul.addr %s143, 8
          %s145 = scalar_lea.vmem %s0, %s144
        $region28: #{low_level_planner_forward_batched.1} parent=23 // pred_fallthru
          _
      $region24: #{low_level_planner_forward_batched.1} parent=5 // pred_fallthru
        _
      %p146 = scmp.le.s32.totalorder 1, %s10
      %p147 = scmp.lt.s32.totalorder %s10, 3
      %p148 = pnand %p146, %p147
      %p149 = pneg %p148
      // Predicated region
      $region29: #{low_level_planner_forward_batched.1} parent=5 // pred_check
        _
      $region30: #{low_level_planner_forward_batched.1} parent=5 // pred_check_branch
        %151 = sbr.rel (%p148) target = $region32
      $region31: #{low_level_planner_forward_batched.1} parent=5 // pred_region
        %s152 = ssub.s32 %s10, 1
        // Predicated region
        $region33: #{low_level_planner_forward_batched.1} parent=31 // pred_check
          %p153 = pneg %p57
        $region34: #{low_level_planner_forward_batched.1} parent=31 // pred_check_branch
          %155 = sbr.rel (%p153) target = $region36
        $region35: #{low_level_planner_forward_batched.1} parent=31 // pred_region
          %156 = dma.done [#allocation3], 2688
        $region36: #{low_level_planner_forward_batched.1} parent=31 // pred_fallthru
          _
        %p157 = scmp.lt.s32.totalorder %s15, 1
        %s158 = scalar_select %p157, %s15, 1
        %s159 = smul.addr %s158, 8
        %s160 = scalar_lea.vmem %s0, %s159
        %p161 = pneg %p36
        %p162 = pneg %p33
        %p163 = pneg %p57
        %p164 = pneg %p54
        %p165 = pneg %p78
        %p166 = pneg %p75
        %p167 = pneg %p104
        %p168 = pneg %p101
        %p169 = scmp.lt.s32.totalorder %s15, 1
        %s170 = scalar_select %p169, %s15, 1
        %s171 = smul.addr %s170, 8
        %s172 = scalar_lea.vmem %s3, %s171
        %p173 = scmp.lt.s32.totalorder %s15, 1
        %s174 = scalar_select %p173, %s15, 1
        %s175 = smul.addr %s174, 8
        %s176 = scalar_lea.vmem %s0, %s175
        %p177 = scmp.lt.s32.totalorder %s15, 1
        %s178 = scalar_select %p177, %s15, 1
        %s179 = smul.addr %s178, 8
        %s180 = scalar_lea.vmem %s3, %s179
        %v182 = vld [vmem:[%s176] sm:$0xff]
        %v183 = vpack.c.bf16 %v182, %v182
        %v184 = vld [vmem:[%s2] sm:$0x1]
        %v185 = vld [vmem:[%s2 + $0x1] sm:$0x1]
        %v186 = vld [vmem:[%s2 + $0x2] sm:$0x1]
        %v187 = vld [vmem:[%s2 + $0x3] sm:$0x1]
        %v188 = vld [vmem:[#allocation2] sm:$0xf]
        %v189 = vld [vmem:[#allocation2 + $0x4] sm:$0xf]
        %v190 = vld [vmem:[#allocation2 + $0x8] sm:$0xf]
        %v191 = vld [vmem:[#allocation2 + $0xc] sm:$0xf]
        %v192 = vlaneseq
        %v193 = vshrl.u32 %v192, 7
        %v194 = vsub.s32 0, %v193
        %v195 = vrot.slane %v184, %v194
        %v200 = vunpack.c.l.b16 %v188
        %v201 = vunpack.c.l.b16 %v189
        %v202 = vunpack.c.l.b16 %v190
        %v203 = vunpack.c.l.b16 %v191
        %v204 = vpack.c.b16 %v201, %v200
        %v205 = vpack.c.b16 %v203, %v202
        %vm208 = vcmask 261120
        %v210 = vsel %vm208, %v183, 0
        %212 = vmatprep.subr.bf16.mxu0 0
        %213 = vmatpush1.bf16.msra.mxu0 %v204
        %214 = vmatprep.subr.bf16.mxu0 0
        %215 = vmatpush1.bf16.msra.mxu0 %v205
        %216 = vmatprep.subr.bf16.mxu0 0
        %217 = vmatpush1.bf16.msra.mxu0 0
        %218 = vmatprep.subr.bf16.mxu0 0
        %219 = vmatpush1.bf16.msra.mxu0 0
        %220 = vmatprep.subr.bf16.mxu0 0
        %221 = vmatpush1.bf16.msra.mxu0 0
        %222 = vmatprep.subr.bf16.mxu0 0
        %223 = vmatpush1.bf16.msra.mxu0 0
        %224 = vmatprep.subr.bf16.mxu0 0
        %225 = vmatpush1.bf16.msra.mxu0 0
        %226 = vmatprep.subr.bf16.mxu0 0
        %227 = vmatpush1.bf16.msra.mxu0 0
        %228 = vmatprep.subr.bf16.mxu0 0
        %229 = vmatpush1.bf16.msra.mxu0 0
        %230 = vmatprep.subr.bf16.mxu0 0
        %231 = vmatpush1.bf16.msra.mxu0 0
        %232 = vmatprep.subr.bf16.mxu0 0
        %233 = vmatpush1.bf16.msra.mxu0 0
        %234 = vmatprep.subr.bf16.mxu0 0
        %235 = vmatpush1.bf16.msra.mxu0 0
        %236 = vmatprep.subr.bf16.mxu0 0
        %237 = vmatpush1.bf16.msra.mxu0 0
        %238 = vmatprep.subr.bf16.mxu0 0
        %239 = vmatpush1.bf16.msra.mxu0 0
        %240 = vmatprep.subr.bf16.mxu0 0
        %241 = vmatpush1.bf16.msra.mxu0 0
        %242 = vmatprep.subr.bf16.mxu0 0
        %243 = vmatpush1.bf16.msra.mxu0 0
        %244 = vmatprep.mubr.bf16.mxu0 0
        %245 = vmatmul.mubr.bf16.gmra.mrb[0].mxu0 %v210
        %v246 = vpop.f32.mrb[0].mxu0
        %v247 = vadd.f32 %v195, %v246
        %v248 = vpop.f32.mrb[0].mxu0
        %v249 = vpop.f32.mrb[0].mxu0
        %v250 = vpop.f32.mrb[0].mxu0
        %251 = vdwg.mxu0
        %v252 = vmax.f32 %v247, 0.0
        %v253 = vpack.c.bf16 %v252, %v252
        %v254 = vld [vmem:[#allocation2 + $0x10] sm:$0xf]
        %v255 = vld [vmem:[#allocation2 + $0x14] sm:$0xf]
        %v256 = vld [vmem:[#allocation2 + $0x18] sm:$0xf]
        %v257 = vld [vmem:[#allocation2 + $0x1c] sm:$0xf]
        %v258 = vlaneseq
        %v259 = vshrl.u32 %v258, 7
        %v260 = vsub.s32 0, %v259
        %v261 = vrot.slane %v185, %v260
        %v266 = vunpack.c.l.b16 %v254
        %v267 = vunpack.c.l.b16 %v255
        %v268 = vunpack.c.l.b16 %v256
        %v269 = vunpack.c.l.b16 %v257
        %v270 = vpack.c.b16 %v267, %v266
        %v271 = vpack.c.b16 %v269, %v268
        %v275 = vsel %vm208, %v253, 0
        %277 = vmatprep.subr.bf16.mxu0 0
        %278 = vmatpush1.bf16.msra.mxu0 %v270
        %279 = vmatprep.subr.bf16.mxu0 0
        %280 = vmatpush1.bf16.msra.mxu0 %v271
        %281 = vmatprep.subr.bf16.mxu0 0
        %282 = vmatpush1.bf16.msra.mxu0 0
        %283 = vmatprep.subr.bf16.mxu0 0
        %284 = vmatpush1.bf16.msra.mxu0 0
        %285 = vmatprep.subr.bf16.mxu0 0
        %286 = vmatpush1.bf16.msra.mxu0 0
        %287 = vmatprep.subr.bf16.mxu0 0
        %288 = vmatpush1.bf16.msra.mxu0 0
        %289 = vmatprep.subr.bf16.mxu0 0
        %290 = vmatpush1.bf16.msra.mxu0 0
        %291 = vmatprep.subr.bf16.mxu0 0
        %292 = vmatpush1.bf16.msra.mxu0 0
        %293 = vmatprep.subr.bf16.mxu0 0
        %294 = vmatpush1.bf16.msra.mxu0 0
        %295 = vmatprep.subr.bf16.mxu0 0
        %296 = vmatpush1.bf16.msra.mxu0 0
        %297 = vmatprep.subr.bf16.mxu0 0
        %298 = vmatpush1.bf16.msra.mxu0 0
        %299 = vmatprep.subr.bf16.mxu0 0
        %300 = vmatpush1.bf16.msra.mxu0 0
        %301 = vmatprep.subr.bf16.mxu0 0
        %302 = vmatpush1.bf16.msra.mxu0 0
        %303 = vmatprep.subr.bf16.mxu0 0
        %304 = vmatpush1.bf16.msra.mxu0 0
        %305 = vmatprep.subr.bf16.mxu0 0
        %306 = vmatpush1.bf16.msra.mxu0 0
        %307 = vmatprep.subr.bf16.mxu0 0
        %308 = vmatpush1.bf16.msra.mxu0 0
        %309 = vmatprep.mubr.bf16.mxu0 0
        %310 = vmatmul.mubr.bf16.gmra.mrb[0].mxu0 %v275
        %v311 = vpop.f32.mrb[0].mxu0
        %v312 = vadd.f32 %v261, %v311
        %v313 = vpop.f32.mrb[0].mxu0
        %v314 = vpop.f32.mrb[0].mxu0
        %v315 = vpop.f32.mrb[0].mxu0
        %316 = vdwg.mxu0
        %v317 = vtanh.pop %v312
        %v318 = vmax.f32 %v317, -1.0
        %v319 = vmin.f32 %v318, 1.0
        %v320 = vadd.f32 %v182, %v319
        %v321 = vpack.c.bf16 %v320, %v320
        %v322 = vld [vmem:[#allocation2 + $0x20] sm:$0xf]
        %v323 = vld [vmem:[#allocation2 + $0x24] sm:$0xf]
        %v324 = vld [vmem:[#allocation2 + $0x28] sm:$0xf]
        %v325 = vld [vmem:[#allocation2 + $0x2c] sm:$0xf]
        %v326 = vld [vmem:[#allocation2 + $0x30] sm:$0xf]
        %v327 = vld [vmem:[#allocation2 + $0x34] sm:$0xf]
        %v328 = vlaneseq
        %v329 = vshrl.u32 %v328, 7
        %v330 = vsub.s32 0, %v329
        %v331 = vrot.slane %v186, %v330
        %v338 = vunpack.c.l.b16 %v322
        %v339 = vunpack.c.l.b16 %v323
        %v340 = vunpack.c.l.b16 %v324
        %v341 = vunpack.c.l.b16 %v325
        %v342 = vunpack.c.l.b16 %v326
        %v343 = vunpack.c.l.b16 %v327
        %v344 = vpack.c.b16 %v339, %v338
        %v345 = vpack.c.b16 %v341, %v340
        %v346 = vpack.c.b16 %v343, %v342
        %vm350 = vcmask 392192
        %v352 = vsel %vm350, %v321, 0
        %354 = vmatprep.subr.bf16.mxu0 0
        %355 = vmatpush1.bf16.msra.mxu0 %v344
        %356 = vmatprep.subr.bf16.mxu0 0
        %357 = vmatpush1.bf16.msra.mxu0 %v345
        %358 = vmatprep.subr.bf16.mxu0 0
        %359 = vmatpush1.bf16.msra.mxu0 %v346
        %360 = vmatprep.subr.bf16.mxu0 0
        %361 = vmatpush1.bf16.msra.mxu0 0
        %362 = vmatprep.subr.bf16.mxu0 0
        %363 = vmatpush1.bf16.msra.mxu0 0
        %364 = vmatprep.subr.bf16.mxu0 0
        %365 = vmatpush1.bf16.msra.mxu0 0
        %366 = vmatprep.subr.bf16.mxu0 0
        %367 = vmatpush1.bf16.msra.mxu0 0
        %368 = vmatprep.subr.bf16.mxu0 0
        %369 = vmatpush1.bf16.msra.mxu0 0
        %370 = vmatprep.subr.bf16.mxu0 0
        %371 = vmatpush1.bf16.msra.mxu0 0
        %372 = vmatprep.subr.bf16.mxu0 0
        %373 = vmatpush1.bf16.msra.mxu0 0
        %374 = vmatprep.subr.bf16.mxu0 0
        %375 = vmatpush1.bf16.msra.mxu0 0
        %376 = vmatprep.subr.bf16.mxu0 0
        %377 = vmatpush1.bf16.msra.mxu0 0
        %378 = vmatprep.subr.bf16.mxu0 0
        %379 = vmatpush1.bf16.msra.mxu0 0
        %380 = vmatprep.subr.bf16.mxu0 0
        %381 = vmatpush1.bf16.msra.mxu0 0
        %382 = vmatprep.subr.bf16.mxu0 0
        %383 = vmatpush1.bf16.msra.mxu0 0
        %384 = vmatprep.subr.bf16.mxu0 0
        %385 = vmatpush1.bf16.msra.mxu0 0
        %386 = vmatprep.mubr.bf16.mxu0 0
        %387 = vmatmul.mubr.bf16.gmra.mrb[0].mxu0 %v352
        %v388 = vpop.f32.mrb[0].mxu0
        %v389 = vadd.f32 %v331, %v388
        %v390 = vpop.f32.mrb[0].mxu0
        %v391 = vpop.f32.mrb[0].mxu0
        %v392 = vpop.f32.mrb[0].mxu0
        %393 = vdwg.mxu0
        %v394 = vmax.f32 %v389, 0.0
        %v395 = vpack.c.bf16 %v394, %v394
        %v396 = vld [vmem:[#allocation2 + $0x38] sm:$0xf]
        %v397 = vld [vmem:[#allocation2 + $0x3c] sm:$0xf]
        %v398 = vld [vmem:[#allocation2 + $0x40] sm:$0xf]
        %v399 = vld [vmem:[#allocation2 + $0x44] sm:$0xf]
        %v400 = vld [vmem:[#allocation2 + $0x48] sm:$0xf]
        %v401 = vld [vmem:[#allocation2 + $0x4c] sm:$0xf]
        %v402 = vld [vmem:[#allocation2 + $0x50] sm:$0xf]
        %v403 = vld [vmem:[#allocation2 + $0x54] sm:$0xf]
        %v404 = vld [vmem:[#allocation2 + $0x58] sm:$0xf]
        %v405 = vld [vmem:[#allocation2 + $0x5c] sm:$0xf]
        %v406 = vld [vmem:[#allocation2 + $0x60] sm:$0xf]
        %v407 = vld [vmem:[#allocation2 + $0x64] sm:$0xf]
        %v408 = vld [vmem:[#allocation2 + $0x68] sm:$0xf]
        %v409 = vld [vmem:[#allocation2 + $0x6c] sm:$0xf]
        %v410 = vld [vmem:[#allocation2 + $0x70] sm:$0xf]
        %v411 = vld [vmem:[#allocation2 + $0x74] sm:$0xf]
        %v412 = vld [vmem:[#allocation2 + $0x78] sm:$0xf]
        %v413 = vld [vmem:[#allocation2 + $0x7c] sm:$0xf]
        %v414 = vld [vmem:[#allocation2 + $0x80] sm:$0xf]
        %v415 = vld [vmem:[#allocation2 + $0x84] sm:$0xf]
        %v416 = vlaneseq
        %v417 = vshrl.u32 %v416, 7
        %v418 = vsub.s32 0, %v417
        %v419 = vrot.slane %v187, %v418
        %v440 = vunpack.c.l.b16 %v396
        %v441 = vunpack.c.l.b16 %v397
        %v442 = vunpack.c.l.b16 %v398
        %v443 = vunpack.c.l.b16 %v399
        %v444 = vunpack.c.l.b16 %v400
        %v445 = vunpack.c.l.b16 %v401
        %v446 = vunpack.c.l.b16 %v402
        %v447 = vunpack.c.l.b16 %v403
        %v448 = vunpack.c.l.b16 %v404
        %v449 = vunpack.c.l.b16 %v405
        %v450 = vunpack.c.l.b16 %v406
        %v451 = vunpack.c.l.b16 %v407
        %v452 = vunpack.c.l.b16 %v408
        %v453 = vunpack.c.l.b16 %v409
        %v454 = vunpack.c.l.b16 %v410
        %v455 = vunpack.c.l.b16 %v411
        %v456 = vunpack.c.l.b16 %v412
        %v457 = vunpack.c.l.b16 %v413
        %v458 = vunpack.c.l.b16 %v414
        %v459 = vunpack.c.l.b16 %v415
        %v460 = vpack.c.b16 %v441, %v440
        %v461 = vpack.c.b16 %v443, %v442
        %v462 = vpack.c.b16 %v445, %v444
        %v463 = vpack.c.b16 %v447, %v446
        %v464 = vpack.c.b16 %v449, %v448
        %v465 = vpack.c.b16 %v451, %v450
        %v466 = vpack.c.b16 %v453, %v452
        %v467 = vpack.c.b16 %v455, %v454
        %v468 = vpack.c.b16 %v457, %v456
        %v469 = vpack.c.b16 %v459, %v458
        %480 = vmatprep.subr.bf16.mxu0 0
        %481 = vmatpush1.bf16.msra.mxu0 %v460
        %482 = vmatprep.subr.bf16.mxu0 0
        %483 = vmatpush1.bf16.msra.mxu0 %v461
        %484 = vmatprep.subr.bf16.mxu0 0
        %485 = vmatpush1.bf16.msra.mxu0 %v462
        %486 = vmatprep.subr.bf16.mxu0 0
        %487 = vmatpush1.bf16.msra.mxu0 %v463
        %488 = vmatprep.subr.bf16.mxu0 0
        %489 = vmatpush1.bf16.msra.mxu0 %v464
        %490 = vmatprep.subr.bf16.mxu0 0
        %491 = vmatpush1.bf16.msra.mxu0 %v465
        %492 = vmatprep.subr.bf16.mxu0 0
        %493 = vmatpush1.bf16.msra.mxu0 %v466
        %494 = vmatprep.subr.bf16.mxu0 0
        %495 = vmatpush1.bf16.msra.mxu0 %v467
        %496 = vmatprep.subr.bf16.mxu0 0
        %497 = vmatpush1.bf16.msra.mxu0 %v468
        %498 = vmatprep.subr.bf16.mxu0 0
        %499 = vmatpush1.bf16.msra.mxu0 %v469
        %500 = vmatprep.subr.bf16.mxu0 0
        %501 = vmatpush1.bf16.msra.mxu0 0
        %502 = vmatprep.subr.bf16.mxu0 0
        %503 = vmatpush1.bf16.msra.mxu0 0
        %504 = vmatprep.subr.bf16.mxu0 0
        %505 = vmatpush1.bf16.msra.mxu0 0
        %506 = vmatprep.subr.bf16.mxu0 0
        %507 = vmatpush1.bf16.msra.mxu0 0
        %508 = vmatprep.subr.bf16.mxu0 0
        %509 = vmatpush1.bf16.msra.mxu0 0
        %510 = vmatprep.subr.bf16.mxu0 0
        %511 = vmatpush1.bf16.msra.mxu0 0
        %512 = vmatprep.mubr.bf16.mxu0 %v210
        %513 = vmatmul.mubr.bf16.gmra.mrb[0].mxu0 %v395
        %v514 = vpop.f32.mrb[0].mxu0
        %v515 = vadd.f32 %v419, %v514
        %v516 = vpop.f32.mrb[0].mxu0
        %v517 = vpop.f32.mrb[0].mxu0
        %v518 = vpop.f32.mrb[0].mxu0
        %519 = vdwg.mxu0
        %v520 = vmul.f32 %v515, %v515
        %v521 = vld [vmem:[#allocation2 + $0x88] sm:$0xf]
        %v522 = vld [vmem:[#allocation2 + $0x8c] sm:$0xf]
        %v523 = vld [vmem:[#allocation2 + $0x90] sm:$0xf]
        %v524 = vld [vmem:[#allocation2 + $0x94] sm:$0xf]
        %v525 = vld [vmem:[#allocation2 + $0x98] sm:$0xf]
        %v526 = vld [vmem:[#allocation2 + $0x9c] sm:$0xf]
        %v527 = vld [vmem:[#allocation2 + $0xa0] sm:$0xf]
        %v528 = vld [vmem:[#allocation2 + $0xa4] sm:$0xf]
        %v529 = vunpack.c.l.bf16 %v521
        %v530 = vunpack.c.l.bf16 %v522
        %v531 = vunpack.c.l.bf16 %v523
        %v532 = vunpack.c.l.bf16 %v524
        %v533 = vunpack.c.l.bf16 %v525
        %v534 = vunpack.c.l.bf16 %v526
        %v535 = vunpack.c.l.bf16 %v527
        %v536 = vunpack.c.l.bf16 %v528
        %vm537 = vcmask 523264
        %v539 = vsel %vm537, %v520, 0
        %541 = vmatprep.subr.mxu0 0.0
        %542 = vmatpush1.msra.mxu0 %v529
        %543 = vmatprep.subr.mxu0 0.0
        %544 = vmatpush1.msra.mxu0 %v530
        %545 = vmatprep.subr.mxu0 0.0
        %546 = vmatpush1.msra.mxu0 %v531
        %547 = vmatprep.subr.mxu0 0.0
        %548 = vmatpush1.msra.mxu0 %v532
        %549 = vmatprep.subr.mxu0 0.0
        %550 = vmatpush1.msra.mxu0 %v533
        %551 = vmatprep.subr.mxu0 0.0
        %552 = vmatpush1.msra.mxu0 %v534
        %553 = vmatprep.subr.mxu0 0.0
        %554 = vmatpush1.msra.mxu0 %v535
        %555 = vmatprep.subr.mxu0 0.0
        %556 = vmatpush1.msra.mxu0 %v536
        %557 = vmatprep.subr.mxu0 0.0
        %558 = vmatpush1.msra.mxu0 0.0
        %559 = vmatprep.subr.mxu0 0.0
        %560 = vmatpush1.msra.mxu0 0.0
        %561 = vmatprep.subr.mxu0 0.0
        %562 = vmatpush1.msra.mxu0 0.0
        %563 = vmatprep.subr.mxu0 0.0
        %564 = vmatpush1.msra.mxu0 0.0
        %565 = vmatprep.subr.mxu0 0.0
        %566 = vmatpush1.msra.mxu0 0.0
        %567 = vmatprep.subr.mxu0 0.0
        %568 = vmatpush1.msra.mxu0 0.0
        %569 = vmatprep.subr.mxu0 0.0
        %570 = vmatpush1.msra.mxu0 0.0
        %571 = vmatprep.subr.mxu0 0.0
        %572 = vmatpush1.msra.mxu0 0.0
        %573 = vmatprep.subr.mxu0 0.0
        %574 = vmatpush1.msra.mxu0 0.0
        %575 = vmatprep.subr.mxu0 0.0
        %576 = vmatpush1.msra.mxu0 0.0
        %577 = vmatprep.subr.mxu0 0.0
        %578 = vmatpush1.msra.mxu0 0.0
        %579 = vmatprep.subr.mxu0 0.0
        %580 = vmatpush1.msra.mxu0 0.0
        %581 = vmatprep.subr.mxu0 0.0
        %582 = vmatpush1.msra.mxu0 0.0
        %583 = vmatprep.subr.mxu0 0.0
        %584 = vmatpush1.msra.mxu0 0.0
        %585 = vmatprep.subr.mxu0 0.0
        %586 = vmatpush1.msra.mxu0 0.0
        %587 = vmatprep.subr.mxu0 0.0
        %588 = vmatpush1.msra.mxu0 0.0
        %589 = vmatprep.subr.mxu0 0.0
        %590 = vmatpush1.msra.mxu0 0.0
        %591 = vmatprep.subr.mxu0 0.0
        %592 = vmatpush1.msra.mxu0 0.0
        %593 = vmatprep.subr.mxu0 0.0
        %594 = vmatpush1.msra.mxu0 0.0
        %595 = vmatprep.subr.mxu0 0.0
        %596 = vmatpush1.msra.mxu0 0.0
        %597 = vmatprep.subr.mxu0 0.0
        %598 = vmatpush1.msra.mxu0 0.0
        %599 = vmatprep.subr.mxu0 0.0
        %600 = vmatpush1.msra.mxu0 0.0
        %601 = vmatprep.subr.mxu0 0.0
        %602 = vmatpush1.msra.mxu0 0.0
        %603 = vmatprep.subr.mxu0 0.0
        %604 = vmatpush1.msra.mxu0 0.0
        %605 = vmatprep.mubr.f32.mxu0 0.0
        %606 = vmatmul.mubr.f32.gmra.mrb[0].mxu0 %v539
        %v607 = vpop.f32.mrb[0].mxu0
        %v608 = vadd.f32 0.0, %v607
        %v609 = vpop.f32.mrb[0].mxu0
        %610 = vdwg.mxu0
        %v611 = vrsqrt.pop %v608
        %v612 = vmul.f32 %v608, %v611
        %vm613 = vcmp.eq.f32.partialorder %v608, inf
        %v614 = vsel %vm613, %v608, %v612
        %vm615 = vcmp.eq.f32.partialorder %v608, 0.0
        %v616 = vand.u32 %v608, 2147483648
        %v617 = vsel %vm615, %v616, %v614
        %618 = vadd.xlane.f32.xlu0 %v617
        %v619 = vpop.xlane.xlu0 %618
        %v620 = vsub.f32 0.0, %v619
        %v621 = vlaneseq
        %v622 = vand.u32 %v621, 127
        %vm623 = vcmp.eq.s32.totalorder %v622, 0
        %v624 = vsel %vm623, %v620, %v319
        %625 = vst [vmem:[%s180] sm:$0xff] %v624
        %p626 = scmp.lt.s32.totalorder %s15, 1
        %s627 = scalar_select %p626, %s15, 1
        %s628 = smul.addr %s627, 8
        %s629 = scalar_lea.vmem %s3, %s628
        // Predicated region
        $region37: #{low_level_planner_forward_batched.1} parent=31 // pred_check
          %p630 = pneg %p101
        $region38: #{low_level_planner_forward_batched.1} parent=31 // pred_check_branch
          %632 = sbr.rel (%p630) target = $region40
        $region39: #{low_level_planner_forward_batched.1} parent=31 // pred_region
          _
        $region40: #{low_level_planner_forward_batched.1} parent=31 // pred_fallthru
          _
      $region32: #{low_level_planner_forward_batched.1} parent=5 // pred_fallthru
        _
      %p633 = scmp.le.s32.totalorder 2, %s10
      // Predicated region
      $region41: #{low_level_planner_forward_batched.1} parent=5 // pred_check
        %p634 = pneg %p633
      $region42: #{low_level_planner_forward_batched.1} parent=5 // pred_check_branch
        %636 = sbr.rel (%p634) target = $region44
      $region43: #{low_level_planner_forward_batched.1} parent=5 // pred_region
        %s637 = ssub.s32 %s10, 2
        // Predicated region
        $region45: #{low_level_planner_forward_batched.1} parent=43 // pred_check
          %p638 = pneg %p107
        $region46: #{low_level_planner_forward_batched.1} parent=43 // pred_check_branch
          %640 = sbr.rel (%p638) target = $region48
        $region47: #{low_level_planner_forward_batched.1} parent=43 // pred_region
          %p641 = scmp.lt.s32.totalorder %s16, 1
          %s642 = scalar_select %p641, %s16, 1
          %s643 = smul.addr %s642, 8
          %s644 = scalar_lea.vmem %s3, %s643
        $region48: #{low_level_planner_forward_batched.1} parent=43 // pred_fallthru
          _
      $region44: #{low_level_planner_forward_batched.1} parent=5 // pred_fallthru
        _
    $region6: #{low_level_planner_forward_batched.1} parent=1 // loop_footer
      %s14 = sadd.s32 1, %s10
    $region7: #{low_level_planner_forward_batched.1} parent=1 // loop_footer_branch
      %9 = sbr.rel target = $region3
    $region8: #{low_level_planner_forward_batched.1} parent=1 // loop_exit
      _
    %645 = vsyncpa [#allocation3], 1
    %s646 = scalar_lea.sflag [#allocation3], 1
    %647 = vsyncpa %s646, 1

</llo_original>
